<compile_context>
chip_gen: v7x
topology: tpu7x:2x2x1
jax: 0.10.0
libtpu: 0.0.40
codegen_flags: <defaults>
</compile_context>

<pallas_src>
import jax
import jax.numpy as jnp
from jax.experimental import pallas as pl
from jax.experimental.pallas import tpu as pltpu


# -----------------------------------------------------------------------------
# Kernel
# -----------------------------------------------------------------------------
def mlp_block_kernel(x_ref, w1_ref, b1_ref, w2_ref, b2_ref, o_ref, acc_ref):
    """One (i, k) grid step of out = relu(x @ W1 + b1) @ W2 + b2.

    i tiles batch rows (parallel); k tiles the 4H hidden dim (reduction).
    acc_ref carries f32 partials of the second matmul across k-steps; b2 and
    the output cast happen once on the final k-step.
    """
    k = pl.program_id(1)

    @pl.when(k == 0)
    def _():
        acc_ref[...] = jnp.zeros_like(acc_ref)

    # lin1 on this 4H-chunk: (tm, H) @ (H, tk) -> f32 (tm, tk), plus bias.
    h = jnp.dot(x_ref[...], w1_ref[...], preferred_element_type=jnp.float32)
    h = h + b1_ref[...]
    # ReLU, then back to the MXU input dtype for the second matmul.
    h = jnp.maximum(h, 0.0).astype(w2_ref.dtype)
    # lin2 partial: (tm, tk) @ (tk, H), accumulated in f32.
    acc_ref[...] += jnp.dot(h, w2_ref[...], preferred_element_type=jnp.float32)

    @pl.when(k == pl.num_programs(1) - 1)
    def _():
        o_ref[...] = (acc_ref[...] + b2_ref[...]).astype(o_ref.dtype)


# -----------------------------------------------------------------------------
# Generation-aware sizing helpers
# -----------------------------------------------------------------------------
def _round_up(x, m):
    return ((x + m - 1) // m) * m


def _round_down(x, m):
    return (x // m) * m


def _tpu_generation():
    try:
        kind = jax.devices()[0].device_kind.lower()
    except Exception:
        return 6
    for g in (7, 6, 5, 4):
        if f"v{g}" in kind:
            return g
    return 6


def _gen_limits(gen):
    """Returns (vmem_limit_bytes, tile_budget_bytes, tm_cap) per TPU gen."""
    if gen >= 7:   # v7x: 64 MiB physical VMEM per TensorCore
        return 52 * 2**20, 44 * 2**20, 512
    if gen == 6:   # v6e: 128 MiB physical; needs tm ~700+ to be MXU-bound
        return 110 * 2**20, 96 * 2**20, 1024
    if gen == 5:   # v5e: 128 MiB physical; roofline crossover near tm~256-512
        return 100 * 2**20, 88 * 2**20, 512
    return 64 * 2**20, 56 * 2**20, 512  # unknown / older: conservative


def _pick_tk(h4_pad, h, budget_bytes, compute_bytes):
    """Largest 128-aligned divisor of h4_pad, capped so the double-buffered
    W1/W2 tiles (4*H*tk*compute_bytes) use at most ~half the VMEM budget and
    tk <= 1024 (bigger tk inflates the (tm,tk) intermediates)."""
    cap = (budget_bytes // 2) // max(4 * h * compute_bytes, 1)
    cap = min(cap, 1024)
    cap = max(_round_down(cap, 128), 128)
    best = 0
    t = 128
    while t <= min(cap, h4_pad):
        if h4_pad % t == 0:
            best = t
        t += 128
    if best == 0:
        best = min(128, h4_pad)
    return best


# -----------------------------------------------------------------------------
# One-time parameter preparation (cast + pad + k-major W1 layout)
# -----------------------------------------------------------------------------
def prepare_mlp_params(w1, b1, w2, b2, *, compute_dtype=jnp.bfloat16,
                       generation=None):
    """Cast weights to the MXU compute dtype ONCE (avoids a full f32->bf16
    weight rewrite on every forward), zero-pad 4H to a multiple of 128 (exact:
    padded units contribute 0), pick tk, and re-lay W1 out k-major as
    [4H/tk, H, tk] so each streamed tile is a contiguous HBM slab."""
    H, H4 = w1.shape
    assert w2.shape == (H4, H), (w1.shape, w2.shape)

    gen = _tpu_generation() if generation is None else generation
    vmem_limit, budget, tm_cap = _gen_limits(gen)
    compute_bytes = jnp.dtype(compute_dtype).itemsize

    h4_pad = _round_up(H4, 128)
    pad = h4_pad - H4

    w1c = jnp.asarray(w1).astype(compute_dtype)
    w2c = jnp.asarray(w2).astype(compute_dtype)
    b1c = jnp.asarray(b1).reshape(1, H4).astype(jnp.float32)
    b2c = jnp.asarray(b2).reshape(1, H).astype(jnp.float32)
    if pad:
        w1c = jnp.pad(w1c, ((0, 0), (0, pad)))
        w2c = jnp.pad(w2c, ((0, pad), (0, 0)))
        b1c = jnp.pad(b1c, ((0, 0), (0, pad)))

    tk = _pick_tk(h4_pad, H, budget, compute_bytes)
    nk = h4_pad // tk
    # k-major layout: each k-step reads a contiguous (H, tk) slab.
    w1c = w1c.reshape(H, nk, tk).transpose(1, 0, 2)

    return dict(w1=w1c, b1=b1c, w2=w2c, b2=b2c, hidden=H, h4_pad=h4_pad,
                tk=tk, nk=nk, compute_dtype=jnp.dtype(compute_dtype),
                generation=gen, vmem_limit=vmem_limit, budget=budget,
                tm_cap=tm_cap)


# -----------------------------------------------------------------------------
# Forward pass
# -----------------------------------------------------------------------------
def mlp_block(x, params, *, out_dtype=None):
    M, H = x.shape
    assert H == params["hidden"], (H, params["hidden"])
    out_dtype = jnp.dtype(x.dtype if out_dtype is None else out_dtype)

    compute_dtype = params["compute_dtype"]
    compute_bytes = compute_dtype.itemsize
    tk, nk = params["tk"], params["nk"]
    gen = params["generation"]
    vmem_limit, budget, tm_cap = (params["vmem_limit"], params["budget"],
                                  params["tm_cap"])

    # ---- Row tile tm: biggest that fits the generation's VMEM budget. ----
    # Fixed (tm-independent): double-buffered W1/W2 tiles + biases.
    fixed = 2 * (H * tk + tk * H) * compute_bytes + 2 * tk * 4 + H * 4
    # Per-row: f32 acc + single-buffered x + single-buffered out +
    # Mosaic's (tm, tk) f32 and compute-dtype 'h' intermediates.
    per_row = (H * 4 + H * compute_bytes + H * out_dtype.itemsize
               + tk * (4 + compute_bytes))
    tm = _round_down(max(budget - fixed, 8 * per_row) // per_row, 8)
    tm = min(max(tm, 8), tm_cap, _round_up(M, 8))
    if gen >= 7 and M >= 16:
        # v7x has 2 TensorCores: keep >= 2 steps on the parallel axis.
        tm = min(tm, _round_up(pl.cdiv(M, 2), 8))
    tm = max(tm, 8)

    # Pad rows so tm divides exactly (padded zero rows sliced off below).
    m_pad = _round_up(M, tm)
    xc = x.astype(compute_dtype)
    if m_pad != M:
        xc = jnp.pad(xc, ((0, m_pad - M), (0, 0)))

    grid = (m_pad // tm, nk)
    num_i = grid[0]

    flops = 4 * m_pad * H * params["h4_pad"]
    bytes_accessed = (
        xc.size * compute_bytes
        + num_i * (params["w1"].size + params["w2"].size) * compute_bytes
        + num_i * params["b1"].size * 4
        + params["b2"].size * 4
        + m_pad * H * out_dtype.itemsize)

    out = pl.pallas_call(
        mlp_block_kernel,
        out_shape=jax.ShapeDtypeStruct((m_pad, H), out_dtype),
        grid=grid,
        in_specs=[
            # x rows: block index constant along k -> single buffer suffices.
            pl.BlockSpec((tm, H), lambda i, k: (i, 0),
                         pipeline_mode=pl.Buffered(1)),
            # W1, stored k-major as (nk, H, tk): contiguous slab per k-step.
            pl.BlockSpec((pl.Squeezed(), H, tk), lambda i, k: (k, 0, 0)),
            # b1 chunk for this k-step.
            pl.BlockSpec((1, tk), lambda i, k: (0, k)),
            # W2 (tk, H) slab at row k*tk: already contiguous.
            pl.BlockSpec((tk, H), lambda i, k: (k, 0)),
            # b2: fully resident, never changes.
            pl.BlockSpec((1, H), lambda i, k: (0, 0),
                         pipeline_mode=pl.Buffered(1)),
        ],
        out_specs=pl.BlockSpec((tm, H), lambda i, k: (i, 0),
                               pipeline_mode=pl.Buffered(1)),
        scratch_shapes=[pltpu.VMEM((tm, H), jnp.float32)],
        compiler_params=pltpu.CompilerParams(
            dimension_semantics=("parallel", "arbitrary"),
            vmem_limit_bytes=vmem_limit,
        ),
        cost_estimate=pl.CostEstimate(
            flops=flops, transcendentals=0, bytes_accessed=bytes_accessed),
    )(xc, params["w1"], params["b1"], params["w2"], params["b2"])

    return out[:M] if m_pad != M else out


# -----------------------------------------------------------------------------
# Parameter init (mimics nn.Linear's U(-1/sqrt(fan_in), 1/sqrt(fan_in)))
# -----------------------------------------------------------------------------
def init_params(key, hidden_size):
    k1, k2, k3, k4 = jax.random.split(key, 4)
    h4 = hidden_size * 4
    bound1 = 1.0 / jnp.sqrt(hidden_size)
    bound2 = 1.0 / jnp.sqrt(h4)
    w1 = jax.random.uniform(k1, (hidden_size, h4), jnp.float32, -bound1, bound1)
    b1 = jax.random.uniform(k2, (h4,), jnp.float32, -bound1, bound1)
    w2 = jax.random.uniform(k3, (h4, hidden_size), jnp.float32, -bound2, bound2)
    b2 = jax.random.uniform(k4, (hidden_size,), jnp.float32, -bound2, bound2)
    return w1, b1, w2, b2


if __name__ == "__main__":
    # NOTE: at this toy size launch overhead dominates; the generation-aware
    # tiling above is what pays off at production shapes (large M, H >= 1024).
    hidden_size = 32
    batch = 8

    key = jax.random.PRNGKey(0)
    kx, kp = jax.random.split(key)
    x = jax.random.normal(kx, (batch, hidden_size), jnp.float32)
    w1, b1, w2, b2 = init_params(kp, hidden_size)

    # One-time weight preparation (cast to bf16, pad 4H, k-major W1 layout).
    params = prepare_mlp_params(w1, b1, w2, b2)

    out = mlp_block(x, params)
    out = jax.block_until_ready(out)
    assert out.shape == (batch, hidden_size)

    # Reference with the same bf16 input/weight rounding as the kernel
    # (f32 accumulation) — matches kernel numerics up to accumulation order.
    xb = x.astype(jnp.bfloat16)
    w1b = w1.astype(jnp.bfloat16)
    w2b = w2.astype(jnp.bfloat16)
    h = jnp.dot(xb, w1b, preferred_element_type=jnp.float32) + b1.reshape(1, -1)
    h = jnp.maximum(h, 0.0).astype(jnp.bfloat16)
    ref = jnp.dot(h, w2b, preferred_element_type=jnp.float32) + b2.reshape(1, -1)

    assert jnp.allclose(out, ref, atol=1e-2, rtol=1e-2), float(
        jnp.max(jnp.abs(out - ref)))

    print("KERNEL_OK")
</pallas_src>

<mosaic_0001>
module attributes {stable_mosaic.version = 11 : i64} {
  func.func @mlp_block_kernel(%arg0: i32, %arg1: i32, %arg2: memref<8x32xbf16, #tpu.memory_space<vmem>>, %arg3: memref<1x32x128xbf16, #tpu.memory_space<vmem>>, %arg4: memref<1x128xf32, #tpu.memory_space<vmem>>, %arg5: memref<128x32xbf16, #tpu.memory_space<vmem>>, %arg6: memref<1x32xf32, #tpu.memory_space<vmem>>, %arg7: memref<8x32xf32, #tpu.memory_space<vmem>>, %arg8: memref<8x32xf32, #tpu.memory_space<vmem>>) attributes {dimension_semantics = [#tpu.dimension_semantics<parallel>, #tpu.dimension_semantics<arbitrary>], iteration_bounds = array<i64: 1, 1>, scalar_prefetch = 0 : i64, scratch_operands = 1 : i64, tpu.core_type = #tpu.core_type<tc>, window_params = [{pipeline_mode = #tpu.pipeline_mode<synchronous>, transform_indices = @transform_0, window_bounds = array<i64: 8, 32>}, {transform_indices = @transform_1, window_bounds = array<i64: 1, 32, 128>}, {transform_indices = @transform_2, window_bounds = array<i64: 1, 128>}, {transform_indices = @transform_3, window_bounds = array<i64: 128, 32>}, {pipeline_mode = #tpu.pipeline_mode<synchronous>, transform_indices = @transform_4, window_bounds = array<i64: 1, 32>}, {pipeline_mode = #tpu.pipeline_mode<synchronous>, transform_indices = @transform_5, window_bounds = array<i64: 8, 32>}]} {
    %c0_i32 = arith.constant 0 : i32
    %0 = arith.cmpi eq, %arg1, %c0_i32 : i32
    %1 = arith.extui %0 : i1 to i32
    %c0_i32_0 = arith.constant 0 : i32
    %2 = arith.cmpi ne, %1, %c0_i32_0 : i32
    scf.if %2 {
      %cst_17 = arith.constant 0.000000e+00 : f32
      %21 = vector.broadcast %cst_17 : f32 to vector<8x32xf32>
      %c0_18 = arith.constant 0 : index
      %c0_19 = arith.constant 0 : index
      %22 = vector.load %arg8[%c0_18, %c0_19] : memref<8x32xf32, #tpu.memory_space<vmem>>, vector<8x32xf32>
      tpu.vector_store %arg8[%c0_18, %c0_19], %21 {strides = array<i32>} : memref<8x32xf32, #tpu.memory_space<vmem>>, vector<8x32xf32>,
    } else {
    }
    %c0 = arith.constant 0 : index
    %c0_1 = arith.constant 0 : index
    %3 = vector.load %arg2[%c0, %c0_1] : memref<8x32xbf16, #tpu.memory_space<vmem>>, vector<8x32xbf16>
    %c0_2 = arith.constant 0 : index
    %c0_3 = arith.constant 0 : index
    %c0_4 = arith.constant 0 : index
    %4 = vector.load %arg3[%c0_2, %c0_3, %c0_4] : memref<1x32x128xbf16, #tpu.memory_space<vmem>>, vector<1x32x128xbf16>
    %5 = vector.shape_cast %4 : vector<1x32x128xbf16> to vector<32x128xbf16>
    %cst = arith.constant dense<0.000000e+00> : vector<8x128xf32>
    %6 = tpu.matmul %3, %5, %cst {dimension_numbers = #tpu.dot_dimension_numbers<[1], [0], [0], [1], [0, 0, 1, 1], [], []>} : vector<8x32xbf16>, vector<32x128xbf16>, vector<8x128xf32> -> vector<8x128xf32>
    %c0_5 = arith.constant 0 : index
    %c0_6 = arith.constant 0 : index
    %7 = vector.load %arg4[%c0_5, %c0_6] : memref<1x128xf32, #tpu.memory_space<vmem>>, vector<1x128xf32>
    %8 = vector.broadcast %7 : vector<1x128xf32> to vector<8x128xf32>
    %9 = arith.addf %6, %8 : vector<8x128xf32>
    %cst_7 = arith.constant 0.000000e+00 : f32
    %10 = vector.broadcast %cst_7 : f32 to vector<8x128xf32>
    %11 = arith.maximumf %9, %10 : vector<8x128xf32>
    %12 = arith.truncf %11 : vector<8x128xf32> to vector<8x128xbf16>
    %c0_8 = arith.constant 0 : index
    %c0_9 = arith.constant 0 : index
    %13 = vector.load %arg8[%c0_8, %c0_9] : memref<8x32xf32, #tpu.memory_space<vmem>>, vector<8x32xf32>
    %c0_10 = arith.constant 0 : index
    %c0_11 = arith.constant 0 : index
    %14 = vector.load %arg5[%c0_10, %c0_11] : memref<128x32xbf16, #tpu.memory_space<vmem>>, vector<128x32xbf16>
    %cst_12 = arith.constant dense<0.000000e+00> : vector<8x32xf32>
    %15 = tpu.matmul %12, %14, %cst_12 {dimension_numbers = #tpu.dot_dimension_numbers<[1], [0], [0], [1], [0, 0, 1, 1], [], []>} : vector<8x128xbf16>, vector<128x32xbf16>, vector<8x32xf32> -> vector<8x32xf32>
    %16 = arith.addf %13, %15 : vector<8x32xf32>
    %c0_13 = arith.constant 0 : index
    %c0_14 = arith.constant 0 : index
    %17 = vector.load %arg8[%c0_13, %c0_14] : memref<8x32xf32, #tpu.memory_space<vmem>>, vector<8x32xf32>
    tpu.vector_store %arg8[%c0_13, %c0_14], %16 {strides = array<i32>} : memref<8x32xf32, #tpu.memory_space<vmem>>, vector<8x32xf32>,
    %c0_i32_15 = arith.constant 0 : i32
    %18 = arith.cmpi eq, %arg1, %c0_i32_15 : i32
    %19 = arith.extui %18 : i1 to i32
    %c0_i32_16 = arith.constant 0 : i32
    %20 = arith.cmpi ne, %19, %c0_i32_16 : i32
    scf.if %20 {
      %c0_17 = arith.constant 0 : index
      %c0_18 = arith.constant 0 : index
      %21 = vector.load %arg8[%c0_17, %c0_18] : memref<8x32xf32, #tpu.memory_space<vmem>>, vector<8x32xf32>
      %c0_19 = arith.constant 0 : index
      %c0_20 = arith.constant 0 : index
      %22 = vector.load %arg6[%c0_19, %c0_20] : memref<1x32xf32, #tpu.memory_space<vmem>>, vector<1x32xf32>
      %23 = vector.broadcast %22 : vector<1x32xf32> to vector<8x32xf32>
      %24 = arith.addf %21, %23 : vector<8x32xf32>
      %c0_21 = arith.constant 0 : index
      %c0_22 = arith.constant 0 : index
      %25 = vector.load %arg7[%c0_21, %c0_22] : memref<8x32xf32, #tpu.memory_space<vmem>>, vector<8x32xf32>
      tpu.vector_store %arg7[%c0_21, %c0_22], %24 {strides = array<i32>} : memref<8x32xf32, #tpu.memory_space<vmem>>, vector<8x32xf32>,
    } else {
    }
    return
  }
  func.func @transform_0(%arg0: i32, %arg1: i32) -> (i32, i32) {
    %c0_i32 = arith.constant 0 : i32
    %c0_i32_0 = arith.constant 0 : i32
    return %arg0, %c0_i32 : i32, i32
  }
  func.func @transform_1(%arg0: i32, %arg1: i32) -> (i32, i32, i32) {
    %c0_i32 = arith.constant 0 : i32
    %c0_i32_0 = arith.constant 0 : i32
    %c0_i32_1 = arith.constant 0 : i32
    return %arg1, %c0_i32, %c0_i32_0 : i32, i32, i32
  }
  func.func @transform_2(%arg0: i32, %arg1: i32) -> (i32, i32) {
    %c0_i32 = arith.constant 0 : i32
    %c0_i32_0 = arith.constant 0 : i32
    return %c0_i32, %arg1 : i32, i32
  }
  func.func @transform_3(%arg0: i32, %arg1: i32) -> (i32, i32) {
    %c0_i32 = arith.constant 0 : i32
    %c0_i32_0 = arith.constant 0 : i32
    return %arg1, %c0_i32 : i32, i32
  }
  func.func @transform_4(%arg0: i32, %arg1: i32) -> (i32, i32) {
    %c0_i32 = arith.constant 0 : i32
    %c0_i32_0 = arith.constant 0 : i32
    %c0_i32_1 = arith.constant 0 : i32
    return %c0_i32, %c0_i32_0 : i32, i32
  }
  func.func @transform_5(%arg0: i32, %arg1: i32) -> (i32, i32) {
    %c0_i32 = arith.constant 0 : i32
    %c0_i32_0 = arith.constant 0 : i32
    return %arg0, %c0_i32 : i32, i32
  }
}

</mosaic_0001>

<llo_original>
// kernel: tpu_custom_call.1
$region0: #{tpu_custom_call.1}
  #allocation0 [shape = 'u32[]', space=smem, size = 0x4, offset = 0x4, fixed_abs, tag = 'smem constant byte address 0x4 - core index']
  #allocation1 [shape = 'u32[144,128]{1,0:T(1,128)}', space=vmem, size = 0x12000, scoped, tag = 'internal scratch']
  #allocation2 [shape = 'f32[8,32]{1,0:T(8,128)}', space=vmem, size = 0x1000, scoped, tag = 'scratch operand']
  %s0 = inlined_call_operand.hbm [shape: bf16[8,32], index: 0, kind: input, shape index: {}]
  %s1 = inlined_call_operand.hbm [shape: bf16[1,32,128], index: 1, kind: input, shape index: {}]
  %s2 = inlined_call_operand.hbm [shape: f32[1,128], index: 2, kind: input, shape index: {}]
  %s3 = inlined_call_operand.hbm [shape: bf16[128,32], index: 3, kind: input, shape index: {}]
  %s4 = inlined_call_operand.hbm [shape: f32[1,32], index: 4, kind: input, shape index: {}]
  %s5 = inlined_call_operand.hbm [shape: f32[8,32], index: 5, kind: output, shape index: {}]
  %s6 = sld [smem:[#allocation0]]
  $region58: #{tpu_custom_call.1} parent=0
    _
  %s8 = ssub.s32 1, %s6
  %s9 = scalar_select 0, %s8, %s6
  $region1: #{tpu_custom_call.1} parent=0
    #allocation3 [shape = 'u8[2048]{0}', space=vmem, size = 0x800, scoped, tag = 'input window, operand 0, single buffered']
    #allocation4 [shape = 's32[1]{0}', space=sflag, size = 0x4, scoped, tag = 'scoped memory for tpu_custom_call.1']
    #allocation5 [shape = 's32[1]{0}', space=sflag, size = 0x4, scoped, tag = 'scoped memory for tpu_custom_call.1']
    #allocation6 [shape = 'u8[8192]{0}', space=vmem, size = 0x2000, scoped, tag = 'input window, operand 1, single buffered']
    #allocation7 [shape = 's32[1]{0}', space=sflag, size = 0x4, scoped, tag = 'scoped memory for tpu_custom_call.1']
    #allocation8 [shape = 'u8[512]{0}', space=vmem, size = 0x400, scoped, tag = 'input window, operand 2, single buffered']
    #allocation9 [shape = 'u8[32768]{0}', space=vmem, size = 0x8000, scoped, tag = 'input window, operand 3, single buffered']
    #allocation10 [shape = 's32[1]{0}', space=sflag, size = 0x4, scoped, tag = 'scoped memory for tpu_custom_call.1']
    #allocation11 [shape = 'u8[512]{0}', space=vmem, size = 0x400, scoped, tag = 'input window, operand 4, single buffered']
    #allocation12 [shape = 'u8[4096]{0}', space=vmem, size = 0x1000, scoped, tag = 'output window, operand 0, single buffered']
    %10 = vsyncpa [#allocation4], 0
    %11 = vsyncpa [#allocation7], 0
    %12 = vsyncpa [#allocation10], 0
    %13 = vsyncpa [#allocation5], 0
    // Predicated region
    $region2: #{tpu_custom_call.1} parent=1 // pred_check
      _
    $region3: #{tpu_custom_call.1} parent=1 // pred_check_branch
      %15 = sbr.rel (0) target = $region5
    $region4: #{tpu_custom_call.1} parent=1 // pred_region
      %s17 = ssub.s32 64, 64
      %18 = vsyncadd [#allocation4], %s17
      %s20 = sshll.u32 [#allocation3], 4
      %s21 = int_to_ptr.vmem [resolvable:$true] %s20
      %23 = dma.hbm_to_vmem [thread:$0]  %s0, 64, %s21, [#allocation4]
    $region5: #{tpu_custom_call.1} parent=1 // pred_fallthru
      _
    // Predicated region
    $region6: #{tpu_custom_call.1} parent=1 // pred_check
      _
    $region7: #{tpu_custom_call.1} parent=1 // pred_check_branch
      %25 = sbr.rel (0) target = $region9
    $region8: #{tpu_custom_call.1} parent=1 // pred_region
      %s27 = ssub.s32 256, 256
      %28 = vsyncadd [#allocation7], %s27
      %s29 = sshll.u32 [#allocation6], 4
      %s30 = int_to_ptr.vmem [resolvable:$true] %s29
      %35 = dma.hbm_to_vmem [thread:$0]  %s1, 256, %s30, [#allocation7], 64, 64, 4
    $region9: #{tpu_custom_call.1} parent=1 // pred_fallthru
      _
    // Predicated region
    $region10: #{tpu_custom_call.1} parent=1 // pred_check
      _
    $region11: #{tpu_custom_call.1} parent=1 // pred_check_branch
      %37 = sbr.rel (0) target = $region13
    $region12: #{tpu_custom_call.1} parent=1 // pred_region
      %s39 = ssub.s32 16, 16
      %40 = vsyncadd [#allocation7], %s39
      %s42 = sshll.u32 [#allocation8], 4
      %s43 = int_to_ptr.vmem [resolvable:$true] %s42
      %45 = dma.hbm_to_vmem [thread:$0]  %s2, 16, %s43, [#allocation7]
    $region13: #{tpu_custom_call.1} parent=1 // pred_fallthru
      _
    // Predicated region
    $region14: #{tpu_custom_call.1} parent=1 // pred_check
      _
    $region15: #{tpu_custom_call.1} parent=1 // pred_check_branch
      %47 = sbr.rel (0) target = $region17
    $region16: #{tpu_custom_call.1} parent=1 // pred_region
      %s49 = ssub.s32 1024, 1024
      %50 = vsyncadd [#allocation10], %s49
      %s51 = sshll.u32 [#allocation9], 4
      %s52 = int_to_ptr.vmem [resolvable:$true] %s51
      %57 = dma.hbm_to_vmem [thread:$0]  %s3, 1024, %s52, [#allocation10], 64, 64, 4
    $region17: #{tpu_custom_call.1} parent=1 // pred_fallthru
      _
    // Predicated region
    $region18: #{tpu_custom_call.1} parent=1 // pred_check
      _
    $region19: #{tpu_custom_call.1} parent=1 // pred_check_branch
      %59 = sbr.rel (0) target = $region21
    $region20: #{tpu_custom_call.1} parent=1 // pred_region
      %s61 = ssub.s32 16, 16
      %62 = vsyncadd [#allocation10], %s61
      %s64 = sshll.u32 [#allocation11], 4
      %s65 = int_to_ptr.vmem [resolvable:$true] %s64
      %67 = dma.hbm_to_vmem [thread:$0]  %s4, 16, %s65, [#allocation10]
    $region21: #{tpu_custom_call.1} parent=1 // pred_fallthru
      _
    // Predicated region
    $region22: #{tpu_custom_call.1} parent=1 // pred_check
      _
    $region23: #{tpu_custom_call.1} parent=1 // pred_check_branch
      %69 = sbr.rel (0) target = $region25
    $region24: #{tpu_custom_call.1} parent=1 // pred_region
      %70 = dma.done [#allocation4], 64
    $region25: #{tpu_custom_call.1} parent=1 // pred_fallthru
      _
    // Predicated region
    $region26: #{tpu_custom_call.1} parent=1 // pred_check
      _
    $region27: #{tpu_custom_call.1} parent=1 // pred_check_branch
      %72 = sbr.rel (0) target = $region29
    $region28: #{tpu_custom_call.1} parent=1 // pred_region
      %73 = dma.done [#allocation7], 256
    $region29: #{tpu_custom_call.1} parent=1 // pred_fallthru
      _
    // Predicated region
    $region30: #{tpu_custom_call.1} parent=1 // pred_check
      _
    $region31: #{tpu_custom_call.1} parent=1 // pred_check_branch
      %75 = sbr.rel (0) target = $region33
    $region32: #{tpu_custom_call.1} parent=1 // pred_region
      %76 = dma.done [#allocation7], 16
    $region33: #{tpu_custom_call.1} parent=1 // pred_fallthru
      _
    // Predicated region
    $region34: #{tpu_custom_call.1} parent=1 // pred_check
      _
    $region35: #{tpu_custom_call.1} parent=1 // pred_check_branch
      %78 = sbr.rel (0) target = $region37
    $region36: #{tpu_custom_call.1} parent=1 // pred_region
      %79 = dma.done [#allocation10], 1024
    $region37: #{tpu_custom_call.1} parent=1 // pred_fallthru
      _
    // Predicated region
    $region38: #{tpu_custom_call.1} parent=1 // pred_check
      _
    $region39: #{tpu_custom_call.1} parent=1 // pred_check_branch
      %81 = sbr.rel (0) target = $region41
    $region40: #{tpu_custom_call.1} parent=1 // pred_region
      %82 = dma.done [#allocation10], 16
    $region41: #{tpu_custom_call.1} parent=1 // pred_fallthru
      _
    %p84 = scmp.eq.s32.totalorder 0, 0
    // Predicated region
    $region42: #{tpu_custom_call.1} parent=1 // pred_check
      %p85 = pneg %p84
    $region43: #{tpu_custom_call.1} parent=1 // pred_check_branch
      %87 = sbr.rel (%p85) target = $region45
    $region44: #{tpu_custom_call.1} parent=1 // pred_region
      %vm88 = vcmask 261120
      %89 = vst.msk [vmem:[#allocation2] sm:$0xff] %vm88, 0.0
    $region45: #{tpu_custom_call.1} parent=1 // pred_fallthru
      _
    %v90 = vld [vmem:[#allocation3] sm:$0xf]
    %v91 = vld [vmem:[#allocation6] sm:$0xf]
    %v92 = vld [vmem:[#allocation6 + $0x4] sm:$0xf]
    %v93 = vld [vmem:[#allocation6 + $0x8] sm:$0xf]
    %v94 = vld [vmem:[#allocation6 + $0xc] sm:$0xf]
    %v95 = vld [vmem:[#allocation8] sm:$0x1]
    %v97 = vlaneseq
    %v98 = vshrl.u32 %v97, 7
    %v99 = vsub.s32 0, %v98
    %v100 = vrot.slane %v95, %v99
    %v106 = vunpack.c.l.b16 %v91
    %v107 = vunpack.c.l.b16 %v92
    %v108 = vunpack.c.l.b16 %v93
    %v109 = vunpack.c.l.b16 %v94
    %v110 = vpack.c.b16 %v107, %v106
    %v111 = vpack.c.b16 %v109, %v108
    %vm114 = vcmask 261120
    %v116 = vsel %vm114, %v90, 0
    %118 = vmatprep.subr.bf16.mxu0 0
    %119 = vmatpush1.bf16.msra.mxu0 %v110
    %120 = vmatprep.subr.bf16.mxu0 0
    %121 = vmatpush1.bf16.msra.mxu0 %v111
    %122 = vmatprep.subr.bf16.mxu0 0
    %123 = vmatpush1.bf16.msra.mxu0 0
    %124 = vmatprep.subr.bf16.mxu0 0
    %125 = vmatpush1.bf16.msra.mxu0 0
    %126 = vmatprep.subr.bf16.mxu0 0
    %127 = vmatpush1.bf16.msra.mxu0 0
    %128 = vmatprep.subr.bf16.mxu0 0
    %129 = vmatpush1.bf16.msra.mxu0 0
    %130 = vmatprep.subr.bf16.mxu0 0
    %131 = vmatpush1.bf16.msra.mxu0 0
    %132 = vmatprep.subr.bf16.mxu0 0
    %133 = vmatpush1.bf16.msra.mxu0 0
    %134 = vmatprep.subr.bf16.mxu0 0
    %135 = vmatpush1.bf16.msra.mxu0 0
    %136 = vmatprep.subr.bf16.mxu0 0
    %137 = vmatpush1.bf16.msra.mxu0 0
    %138 = vmatprep.subr.bf16.mxu0 0
    %139 = vmatpush1.bf16.msra.mxu0 0
    %140 = vmatprep.subr.bf16.mxu0 0
    %141 = vmatpush1.bf16.msra.mxu0 0
    %142 = vmatprep.subr.bf16.mxu0 0
    %143 = vmatpush1.bf16.msra.mxu0 0
    %144 = vmatprep.subr.bf16.mxu0 0
    %145 = vmatpush1.bf16.msra.mxu0 0
    %146 = vmatprep.subr.bf16.mxu0 0
    %147 = vmatpush1.bf16.msra.mxu0 0
    %148 = vmatprep.subr.bf16.mxu0 0
    %149 = vmatpush1.bf16.msra.mxu0 0
    %150 = vmatprep.mubr.bf16.mxu0 0
    %151 = vmatmul.mubr.bf16.gmra.mrb[0].mxu0 %v116
    %v152 = vpop.f32.mrb[0].mxu0
    %v153 = vadd.f32 %v100, %v152
    %v154 = vpop.f32.mrb[0].mxu0
    %v155 = vpop.f32.mrb[0].mxu0
    %v156 = vpop.f32.mrb[0].mxu0
    %157 = vdwg.mxu0
    %v158 = vmax.f32 %v153, 0.0
    %v159 = vpack.c.bf16 %v158, %v158
    %v160 = vld [vmem:[#allocation2] sm:$0xff]
    %v161 = vld [vmem:[#allocation9] sm:$0xf]
    %v162 = vld [vmem:[#allocation9 + $0x4] sm:$0xf]
    %v163 = vld [vmem:[#allocation9 + $0x8] sm:$0xf]
    %v164 = vld [vmem:[#allocation9 + $0xc] sm:$0xf]
    %v165 = vld [vmem:[#allocation9 + $0x10] sm:$0xf]
    %v166 = vld [vmem:[#allocation9 + $0x14] sm:$0xf]
    %v167 = vld [vmem:[#allocation9 + $0x18] sm:$0xf]
    %v168 = vld [vmem:[#allocation9 + $0x1c] sm:$0xf]
    %v169 = vld [vmem:[#allocation9 + $0x20] sm:$0xf]
    %v170 = vld [vmem:[#allocation9 + $0x24] sm:$0xf]
    %v171 = vld [vmem:[#allocation9 + $0x28] sm:$0xf]
    %v172 = vld [vmem:[#allocation9 + $0x2c] sm:$0xf]
    %v173 = vld [vmem:[#allocation9 + $0x30] sm:$0xf]
    %v174 = vld [vmem:[#allocation9 + $0x34] sm:$0xf]
    %v175 = vld [vmem:[#allocation9 + $0x38] sm:$0xf]
    %v176 = vld [vmem:[#allocation9 + $0x3c] sm:$0xf]
    %v193 = vunpack.c.l.b16 %v161
    %v194 = vunpack.c.l.b16 %v162
    %v195 = vunpack.c.l.b16 %v163
    %v196 = vunpack.c.l.b16 %v164
    %v197 = vunpack.c.l.b16 %v165
    %v198 = vunpack.c.l.b16 %v166
    %v199 = vunpack.c.l.b16 %v167
    %v200 = vunpack.c.l.b16 %v168
    %v201 = vunpack.c.l.b16 %v169
    %v202 = vunpack.c.l.b16 %v170
    %v203 = vunpack.c.l.b16 %v171
    %v204 = vunpack.c.l.b16 %v172
    %v205 = vunpack.c.l.b16 %v173
    %v206 = vunpack.c.l.b16 %v174
    %v207 = vunpack.c.l.b16 %v175
    %v208 = vunpack.c.l.b16 %v176
    %v209 = vpack.c.b16 %v194, %v193
    %v210 = vpack.c.b16 %v196, %v195
    %v211 = vpack.c.b16 %v198, %v197
    %v212 = vpack.c.b16 %v200, %v199
    %v213 = vpack.c.b16 %v202, %v201
    %v214 = vpack.c.b16 %v204, %v203
    %v215 = vpack.c.b16 %v206, %v205
    %v216 = vpack.c.b16 %v208, %v207
    %225 = vmatprep.subr.bf16.mxu0 0
    %226 = vmatpush1.bf16.msra.mxu0 %v209
    %227 = vmatprep.subr.bf16.mxu0 0
    %228 = vmatpush1.bf16.msra.mxu0 %v210
    %229 = vmatprep.subr.bf16.mxu0 0
    %230 = vmatpush1.bf16.msra.mxu0 %v211
    %231 = vmatprep.subr.bf16.mxu0 0
    %232 = vmatpush1.bf16.msra.mxu0 %v212
    %233 = vmatprep.subr.bf16.mxu0 0
    %234 = vmatpush1.bf16.msra.mxu0 %v213
    %235 = vmatprep.subr.bf16.mxu0 0
    %236 = vmatpush1.bf16.msra.mxu0 %v214
    %237 = vmatprep.subr.bf16.mxu0 0
    %238 = vmatpush1.bf16.msra.mxu0 %v215
    %239 = vmatprep.subr.bf16.mxu0 0
    %240 = vmatpush1.bf16.msra.mxu0 %v216
    %241 = vmatprep.subr.bf16.mxu0 0
    %242 = vmatpush1.bf16.msra.mxu0 0
    %243 = vmatprep.subr.bf16.mxu0 0
    %244 = vmatpush1.bf16.msra.mxu0 0
    %245 = vmatprep.subr.bf16.mxu0 0
    %246 = vmatpush1.bf16.msra.mxu0 0
    %247 = vmatprep.subr.bf16.mxu0 0
    %248 = vmatpush1.bf16.msra.mxu0 0
    %249 = vmatprep.subr.bf16.mxu0 0
    %250 = vmatpush1.bf16.msra.mxu0 0
    %251 = vmatprep.subr.bf16.mxu0 0
    %252 = vmatpush1.bf16.msra.mxu0 0
    %253 = vmatprep.subr.bf16.mxu0 0
    %254 = vmatpush1.bf16.msra.mxu0 0
    %255 = vmatprep.subr.bf16.mxu0 0
    %256 = vmatpush1.bf16.msra.mxu0 0
    %257 = vmatprep.mubr.bf16.mxu0 0
    %258 = vmatmul.mubr.bf16.gmra.mrb[0].mxu0 %v159
    %v259 = vpop.f32.mrb[0].mxu0
    %v260 = vadd.f32 0.0, %v259
    %v261 = vpop.f32.mrb[0].mxu0
    %v262 = vpop.f32.mrb[0].mxu0
    %v263 = vpop.f32.mrb[0].mxu0
    %264 = vdwg.mxu0
    %v265 = vadd.f32 %v160, %v260
    %266 = vst.msk [vmem:[#allocation2] sm:$0xff] %vm114, %v265
    // Predicated region
    $region46: #{tpu_custom_call.1} parent=1 // pred_check
      %p267 = pneg %p84
    $region47: #{tpu_custom_call.1} parent=1 // pred_check_branch
      %269 = sbr.rel (%p267) target = $region49
    $region48: #{tpu_custom_call.1} parent=1 // pred_region
      %v270 = vld [vmem:[#allocation2] sm:$0xff]
      %v271 = vld [vmem:[#allocation11] sm:$0x1]
      %v273 = vlaneseq
      %v274 = vshrl.u32 %v273, 7
      %v275 = vsub.s32 0, %v274
      %v276 = vrot.slane %v271, %v275
      %v278 = vadd.f32 %v270, %v276
      %279 = vst.msk [vmem:[#allocation12] sm:$0xff] %vm114, %v278
    $region49: #{tpu_custom_call.1} parent=1 // pred_fallthru
      _
    // Predicated region
    $region50: #{tpu_custom_call.1} parent=1 // pred_check
      _
    $region51: #{tpu_custom_call.1} parent=1 // pred_check_branch
      %281 = sbr.rel (0) target = $region53
    $region52: #{tpu_custom_call.1} parent=1 // pred_region
      %s283 = ssub.s32 128, 128
      %284 = vsyncadd [#allocation5], %s283
      %s286 = sshll.u32 [#allocation12], 4
      %s287 = int_to_ptr.vmem [resolvable:$true] %s286
      %289 = dma.vmem_to_hbm [thread:$0]  %s287, 128, %s5, [#allocation5]
    $region53: #{tpu_custom_call.1} parent=1 // pred_fallthru
      _
    // Predicated region
    $region54: #{tpu_custom_call.1} parent=1 // pred_check
      _
    $region55: #{tpu_custom_call.1} parent=1 // pred_check_branch
      %291 = sbr.rel (0) target = $region57
    $region56: #{tpu_custom_call.1} parent=1 // pred_region
      %292 = dma.done [#allocation5], 128
    $region57: #{tpu_custom_call.1} parent=1 // pred_fallthru
      _
    %293 = vsyncpa [#allocation4], 1
    %294 = vsyncpa [#allocation7], 1
    %295 = vsyncpa [#allocation10], 1
    %296 = vsyncpa [#allocation5], 1

</llo_original>
